<compile_context>
chip_gen: v7x
topology: tpu7x:2x2x1
jax: 0.10.0
libtpu: 0.0.40
codegen_flags: <defaults>
</compile_context>

<pallas_src>
import numpy as np
import jax
import jax.numpy as jnp
from jax import lax
from jax.experimental import pallas as pl
from jax.experimental.pallas import tpu as pltpu


def _band_matrix(l_in, kernel_size, stride, pad, l_out):
    """Static (l_out, l_in) f32 matrix: A @ x reproduces replicate-padding by
    `pad` followed by AvgPool1d(kernel_size, stride) over the time axis."""
    rows = np.repeat(np.arange(l_out)[:, None], kernel_size, axis=1)      # (l_out, K)
    src = np.clip(rows * stride + np.arange(kernel_size)[None, :] - pad,
                  0, l_in - 1)                                            # (l_out, K)
    a = np.zeros((l_out, l_in), dtype=np.float32)
    np.add.at(a, (rows, src), 1.0 / kernel_size)   # duplicates accumulate (edges)
    return jnp.asarray(a)


def _moving_avg_kernel(a_ref, x_ref, o_ref):
    # a_ref: (L_out, L) f32 averaging band matrix (padding + 1/K folded in);
    #        constant index_map -> stays VMEM-resident across the whole grid.
    # x_ref: (L, nt) input tile  (time on sublanes, channels on lanes).
    # o_ref: (L_out, nt) output tile.
    o_ref[...] = jnp.dot(
        a_ref[...],
        x_ref[...].astype(jnp.float32),
        preferred_element_type=jnp.float32,
    ).astype(o_ref.dtype)


def _vmem_capacity_bytes():
    try:
        return int(pltpu.get_tpu_info().vmem_capacity_bytes)
    except Exception:
        return 64 * 1024 * 1024   # conservative: v7x per-TensorCore VMEM


def _moving_avg_xla(x, kernel_size, stride):
    """Pure-XLA fallback (tiny tensors, or very long L where the dense band
    matrix would be too large)."""
    pad = (kernel_size - 1) // 2
    front = jnp.repeat(x[:, :1, :], pad, axis=1)
    end = jnp.repeat(x[:, -1:, :], pad, axis=1)
    xp = jnp.concatenate([front, x, end], axis=1).astype(jnp.float32)
    s = lax.reduce_window(
        xp, 0.0, lax.add,
        window_dimensions=(1, kernel_size, 1),
        window_strides=(1, stride, 1),
        padding="VALID")
    return (s * (1.0 / kernel_size)).astype(x.dtype)


def moving_avg(x, kernel_size, stride=1, *, use_pallas=None):
    """x: (B, L, C) -> (B, L_out, C), matching the PyTorch moving_avg module."""
    B, L, C = x.shape
    pad = (kernel_size - 1) // 2
    l_pad = L + 2 * pad
    l_out = (l_pad - kernel_size) // stride + 1
    if l_out < 1:
        raise ValueError("kernel_size too large for this sequence length")

    itemsize = jnp.dtype(x.dtype).itemsize
    if use_pallas is None:
        # Tiny tensors: pallas_call launch overhead dominates; XLA wins.
        use_pallas = x.size * itemsize >= 256 * 1024

    a_bytes = l_out * L * 4
    # TODO(synk): for very long sequences the dense (L_out, L) averaging matrix
    # gets large; a shifted-add Pallas kernel would be the better path there.
    if a_bytes > (16 << 20):
        use_pallas = False
    if not use_pallas:
        return _moving_avg_xla(x, kernel_size, stride)

    a = _band_matrix(L, kernel_size, stride, pad, l_out)   # (L_out, L) f32

    # --- channel-chunk (lane) sizing --------------------------------------
    # Blocks are (L, nt): bigger blocks amortize the ~0.35us per-grid-step
    # overhead.  v5e/v6e have 128 MiB VMEM -> ~4 MiB blocks; v7x has 64 MiB
    # per TensorCore -> ~2 MiB blocks.
    vmem_cap = _vmem_capacity_bytes()
    target_block_bytes = (4 << 20) if vmem_cap >= (96 << 20) else (2 << 20)
    max_nt = max(128, (target_block_bytes // (itemsize * L)) // 128 * 128)
    nt = C if C <= max_nt else max_nt
    # Ensure >= 2 grid steps when possible so both v7x TensorCores
    # ("parallel" semantics) stream HBM concurrently.
    if B == 1 and C > 128 and pl.cdiv(C, nt) < 2:
        half = (C + 1) // 2
        nt = max(128, ((half + 127) // 128) * 128)
    grid = (B, pl.cdiv(C, nt))

    # --- scoped-VMEM budget (v5e's default limit is only 16 MiB) ----------
    in_block = L * nt * itemsize
    out_block = l_out * nt * itemsize
    temps = (L + l_out) * nt * 4            # f32 upcast + f32 matmul result
    budget = 2 * a_bytes + 2 * (in_block + out_block) + temps
    vmem_limit = max(min(vmem_cap - (8 << 20), max(2 * budget, 32 << 20)),
                     budget + (4 << 20))

    cost = pl.CostEstimate(
        flops=2 * B * C * l_out * L,
        transcendentals=0,
        bytes_accessed=B * C * (L + l_out) * itemsize + a_bytes,
    )

    return pl.pallas_call(
        _moving_avg_kernel,
        out_shape=jax.ShapeDtypeStruct((B, l_out, C), x.dtype),
        grid=grid,
        in_specs=[
            # Averaging matrix: constant block index -> fetched once, resident.
            pl.BlockSpec((l_out, L), lambda b, j: (0, 0)),
            # Input: batch squeezed out, full time axis, lane chunk of channels.
            pl.BlockSpec((pl.Squeezed(), L, nt), lambda b, j: (b, 0, j)),
        ],
        out_specs=pl.BlockSpec((pl.Squeezed(), l_out, nt), lambda b, j: (b, 0, j)),
        compiler_params=pltpu.CompilerParams(
            dimension_semantics=("parallel", "parallel"),
            vmem_limit_bytes=int(vmem_limit),
        ),
        cost_estimate=cost,
    )(a, x)


def _moving_avg_ref(x, kernel_size, stride):
    # Pure-JAX reference mirroring the PyTorch code (f32 result).
    pad = (kernel_size - 1) // 2
    front = jnp.repeat(x[:, :1, :], pad, axis=1)
    end = jnp.repeat(x[:, -1:, :], pad, axis=1)
    xp = jnp.concatenate([front, x, end], axis=1).astype(jnp.float32)
    l_pad = xp.shape[1]
    l_out = (l_pad - kernel_size) // stride + 1
    windows = jnp.stack(
        [xp[:, k * stride:k * stride + kernel_size, :] for k in range(l_out)],
        axis=1)  # (B, L_out, K, C)
    return windows.mean(axis=2)


if __name__ == "__main__":
    # 1) K=5, stride=1, small f32 (forced through the Pallas path).
    xa = jax.random.normal(jax.random.PRNGKey(0), (2, 16, 8), dtype=jnp.float32)
    outa = jax.block_until_ready(moving_avg(xa, 5, 1, use_pallas=True))
    refa = _moving_avg_ref(xa, 5, 1)
    assert outa.shape == refa.shape, (outa.shape, refa.shape)
    assert jnp.allclose(outa, refa, atol=1e-5, rtol=1e-5), "mismatch (K=5)"

    # 2) PowerMamba/DLinear-style K=25.
    xb = jax.random.normal(jax.random.PRNGKey(1), (2, 48, 96), dtype=jnp.float32)
    outb = jax.block_until_ready(moving_avg(xb, 25, 1, use_pallas=True))
    refb = _moving_avg_ref(xb, 25, 1)
    assert outb.shape == refb.shape, (outb.shape, refb.shape)
    assert jnp.allclose(outb, refb, atol=1e-4, rtol=1e-4), "mismatch (K=25)"

    # 3) stride=2 (row-subsampled band matrix).
    xc = jax.random.normal(jax.random.PRNGKey(2), (2, 40, 32), dtype=jnp.float32)
    outc = jax.block_until_ready(moving_avg(xc, 7, 2, use_pallas=True))
    refc = _moving_avg_ref(xc, 7, 2)
    assert outc.shape == refc.shape, (outc.shape, refc.shape)
    assert jnp.allclose(outc, refc, atol=1e-5, rtol=1e-5), "mismatch (stride=2)"

    # 4) bf16 input/output (f32 accumulation inside the kernel).
    xd = jax.random.normal(jax.random.PRNGKey(3), (2, 48, 96), dtype=jnp.bfloat16)
    outd = jax.block_until_ready(moving_avg(xd, 25, 1, use_pallas=True))
    refd = _moving_avg_ref(xd.astype(jnp.float32), 25, 1)
    assert outd.shape == refd.shape, (outd.shape, refd.shape)
    assert jnp.allclose(outd.astype(jnp.float32), refd, atol=3e-2, rtol=3e-2), \
        "mismatch (bf16)"

    # 5) B=1 lane-chunking path (2 chunks of 128 lanes, last one partial/masked).
    xe = jax.random.normal(jax.random.PRNGKey(4), (1, 32, 200), dtype=jnp.float32)
    oute = jax.block_until_ready(moving_avg(xe, 25, 1, use_pallas=True))
    refe = _moving_avg_ref(xe, 25, 1)
    assert oute.shape == refe.shape, (oute.shape, refe.shape)
    assert jnp.allclose(oute, refe, atol=1e-4, rtol=1e-4), "mismatch (chunked)"

    # 6) Tiny-tensor default path (pure-XLA fallback).
    outf = jax.block_until_ready(moving_avg(xa, 5, 1))
    assert jnp.allclose(outf, refa, atol=1e-5, rtol=1e-5), "mismatch (fallback)"

    print("KERNEL_OK")
</pallas_src>

<mosaic_0001>
module attributes {stable_mosaic.version = 11 : i64} {
  func.func @_moving_avg_kernel(%arg0: i32, %arg1: i32, %arg2: memref<16x16xf32, #tpu.memory_space<vmem>>, %arg3: memref<1x16x8xf32, #tpu.memory_space<vmem>>, %arg4: memref<1x16x8xf32, #tpu.memory_space<vmem>>) attributes {dimension_semantics = [#tpu.dimension_semantics<parallel>, #tpu.dimension_semantics<parallel>], iteration_bounds = array<i64: 2, 1>, scalar_prefetch = 0 : i64, scratch_operands = 0 : i64, tpu.core_type = #tpu.core_type<tc>, window_params = [{pipeline_mode = #tpu.pipeline_mode<synchronous>, transform_indices = @transform_0, window_bounds = array<i64: 16, 16>}, {transform_indices = @transform_1, window_bounds = array<i64: 1, 16, 8>}, {transform_indices = @transform_2, window_bounds = array<i64: 1, 16, 8>}]} {
    %c0 = arith.constant 0 : index
    %c0_0 = arith.constant 0 : index
    %0 = vector.load %arg2[%c0, %c0_0] : memref<16x16xf32, #tpu.memory_space<vmem>>, vector<16x16xf32>
    %c0_1 = arith.constant 0 : index
    %c0_2 = arith.constant 0 : index
    %c0_3 = arith.constant 0 : index
    %1 = vector.load %arg3[%c0_1, %c0_2, %c0_3] : memref<1x16x8xf32, #tpu.memory_space<vmem>>, vector<1x16x8xf32>
    %2 = vector.shape_cast %1 : vector<1x16x8xf32> to vector<16x8xf32>
    %cst = arith.constant dense<0.000000e+00> : vector<16x8xf32>
    %3 = tpu.matmul %0, %2, %cst {dimension_numbers = #tpu.dot_dimension_numbers<[1], [0], [0], [1], [0, 0, 1, 1], [], []>} : vector<16x16xf32>, vector<16x8xf32>, vector<16x8xf32> -> vector<16x8xf32>
    %c0_4 = arith.constant 0 : index
    %c0_5 = arith.constant 0 : index
    %c0_6 = arith.constant 0 : index
    %4 = vector.load %arg4[%c0_4, %c0_5, %c0_6] : memref<1x16x8xf32, #tpu.memory_space<vmem>>, vector<1x16x8xf32>
    %5 = vector.shape_cast %4 : vector<1x16x8xf32> to vector<16x8xf32>
    %6 = vector.shape_cast %3 : vector<16x8xf32> to vector<1x16x8xf32>
    tpu.vector_store %arg4[%c0_4, %c0_5, %c0_6], %6 {strides = array<i32>} : memref<1x16x8xf32, #tpu.memory_space<vmem>>, vector<1x16x8xf32>,
    return
  }
  func.func @transform_0(%arg0: i32, %arg1: i32) -> (i32, i32) {
    %c0_i32 = arith.constant 0 : i32
    %c0_i32_0 = arith.constant 0 : i32
    %c0_i32_1 = arith.constant 0 : i32
    return %c0_i32, %c0_i32_0 : i32, i32
  }
  func.func @transform_1(%arg0: i32, %arg1: i32) -> (i32, i32, i32) {
    %c0_i32 = arith.constant 0 : i32
    %c0_i32_0 = arith.constant 0 : i32
    return %arg0, %c0_i32, %arg1 : i32, i32, i32
  }
  func.func @transform_2(%arg0: i32, %arg1: i32) -> (i32, i32, i32) {
    %c0_i32 = arith.constant 0 : i32
    %c0_i32_0 = arith.constant 0 : i32
    return %arg0, %c0_i32, %arg1 : i32, i32, i32
  }
}

</mosaic_0001>

<llo_original>
// kernel: tpu_custom_call.1
$region0: #{tpu_custom_call.1}
  #allocation0 [shape = 'u32[]', space=smem, size = 0x4, offset = 0x4, fixed_abs, tag = 'smem constant byte address 0x4 - core index']
  #allocation1 [shape = 'u32[144,128]{1,0:T(1,128)}', space=vmem, size = 0x12000, scoped, tag = 'internal scratch']
  %s0 = inlined_call_operand.vmem [shape: f32[16,16], index: 0, kind: input, shape index: {}]
  %s1 = inlined_call_operand.vmem [shape: f32[2,16,8], index: 1, kind: input, shape index: {}]
  %s2 = inlined_call_operand.vmem [shape: f32[2,16,8], index: 2, kind: output, shape index: {}]
  %s3 = sld [smem:[#allocation0]]
  $region41: #{tpu_custom_call.1} parent=0
    _
  %s5 = ssub.s32 1, %s3
  %s6 = scalar_select 0, %s5, %s3
  loop: start=0, step=1, limit=4
  $region2: #{tpu_custom_call.1} parent=0 // loop_pre_header
    _
  $region3: #{tpu_custom_call.1} parent=0 // loop_header
    %s8 = sphi 0, %s12
    %p9 = scmp.ge.s32.totalorder %s8, 4
    %s15 = sphi 0, %s27
    %s16 = sphi 0, %s23
    %s17 = sphi 0, %s15
    %s18 = sphi 0, %s16
    %s19 = sphi 0, %s17
    %s20 = sphi 0, %s18
    %s28 = sphi 0, %s28
    %s30 = sphi 0, %s28
    %s31 = sphi 0, %s30
    %s45 = sphi 0, %s31
    %s53 = sphi 0, %s55
    %s56 = sphi 0, %s53
    %s57 = sphi 0, %s56
    %s73 = sphi 0, %s57
    %s81 = sphi 0, %s83
    %s84 = sphi 0, %s81
    %s85 = sphi 0, %s84
    %s101 = sphi 0, %s85
  $region4: #{tpu_custom_call.1} parent=0 // loop_header_branch
    %11 = sbr.rel (%p9) target = $region8
  $region5: #{tpu_custom_call.1} parent=0 // loop_body
    %s13 = ssub.s32 %s8, 1
    %s14 = ssub.s32 %s8, 2
    %s21 = sadd.s32 1, %s16
    %p22 = scmp.ge.s32.totalorder %s21, 1
    %s23 = scalar_select %p22, 0, %s21
    %s24 = sadd.s32 1, %s15
    %s25 = scalar_select %p22, %s24, %s15
    %p26 = scmp.ge.s32.totalorder %s25, 2
    %s27 = scalar_select %p26, 0, %s25
    %s29 = sadd.s32 %s28, 1
    %p32 = scmp.eq.s32.totalorder %s8, 1
    %p33 = scmp.ne.s32.totalorder %s28, %s30
    %p34 = scmp.eq.s32.totalorder %s8, 0
    %p35 = por %p33, %p34
    %p36 = scmp.ne.s32.totalorder %s28, %s30
    %p37 = scmp.eq.s32.totalorder %s13, 1
    %p38 = por %p36, %p37
    %p39 = scmp.ne.s32.totalorder %s30, %s31
    %p40 = scmp.eq.s32.totalorder %s13, 0
    %p41 = por %p39, %p40
    %p42 = scmp.ne.s32.totalorder %s30, %s31
    %p43 = scmp.eq.s32.totalorder %s14, 1
    %p44 = por %p42, %p43
    %p46 = scmp.ne.s32.totalorder %s31, %s45
    %p47 = scmp.eq.s32.totalorder %s14, 0
    %p48 = por %p46, %p47
    %s49 = ssub.s32 %s15, %s27
    %s50 = ssub.s32 %s16, %s23
    %s51 = sor.u32 %s49, %s50
    %p52 = scmp.eq.s32.totalorder %s51, 0
    %s54 = sadd.s32 %s53, 1
    %s55 = scalar_select %p52, %s53, %s54
    %p58 = pneg %p52
    %p59 = scmp.eq.s32.totalorder %s8, 1
    %p60 = por %p58, %p59
    %p61 = scmp.ne.s32.totalorder %s53, %s56
    %p62 = scmp.eq.s32.totalorder %s8, 0
    %p63 = por %p61, %p62
    %p64 = scmp.ne.s32.totalorder %s53, %s56
    %p65 = scmp.eq.s32.totalorder %s13, 1
    %p66 = por %p64, %p65
    %p67 = scmp.ne.s32.totalorder %s56, %s57
    %p68 = scmp.eq.s32.totalorder %s13, 0
    %p69 = por %p67, %p68
    %p70 = scmp.ne.s32.totalorder %s56, %s57
    %p71 = scmp.eq.s32.totalorder %s14, 1
    %p72 = por %p70, %p71
    %p74 = scmp.ne.s32.totalorder %s57, %s73
    %p75 = scmp.eq.s32.totalorder %s14, 0
    %p76 = por %p74, %p75
    %s77 = ssub.s32 %s15, %s27
    %s78 = ssub.s32 %s16, %s23
    %s79 = sor.u32 %s77, %s78
    %p80 = scmp.eq.s32.totalorder %s79, 0
    %s82 = sadd.s32 %s81, 1
    %s83 = scalar_select %p80, %s81, %s82
    %p86 = pneg %p80
    %p87 = scmp.eq.s32.totalorder %s8, 1
    %p88 = por %p86, %p87
    %p89 = scmp.ne.s32.totalorder %s81, %s84
    %p90 = scmp.eq.s32.totalorder %s8, 0
    %p91 = por %p89, %p90
    %p92 = scmp.ne.s32.totalorder %s81, %s84
    %p93 = scmp.eq.s32.totalorder %s13, 1
    %p94 = por %p92, %p93
    %p95 = scmp.ne.s32.totalorder %s84, %s85
    %p96 = scmp.eq.s32.totalorder %s13, 0
    %p97 = por %p95, %p96
    %p98 = scmp.ne.s32.totalorder %s84, %s85
    %p99 = scmp.eq.s32.totalorder %s14, 1
    %p100 = por %p98, %p99
    %p102 = scmp.ne.s32.totalorder %s85, %s101
    %p103 = scmp.eq.s32.totalorder %s14, 0
    %p104 = por %p102, %p103
    %p105 = scmp.le.s32.totalorder 1, %s8
    %p106 = scmp.lt.s32.totalorder %s8, 3
    %p107 = pnand %p105, %p106
    %p108 = pneg %p107
    // Predicated region
    $region9: #{tpu_custom_call.1} parent=5 // pred_check
      _
    $region10: #{tpu_custom_call.1} parent=5 // pred_check_branch
      %110 = sbr.rel (%p107) target = $region12
    $region11: #{tpu_custom_call.1} parent=5 // pred_region
      %s111 = ssub.s32 %s8, 1
      // Predicated region
      $region13: #{tpu_custom_call.1} parent=11 // pred_check
        %p112 = pneg %p41
      $region14: #{tpu_custom_call.1} parent=11 // pred_check_branch
        %114 = sbr.rel (%p112) target = $region16
      $region15: #{tpu_custom_call.1} parent=11 // pred_region
        _
      $region16: #{tpu_custom_call.1} parent=11 // pred_fallthru
        _
    $region12: #{tpu_custom_call.1} parent=5 // pred_fallthru
      _
    %p115 = scmp.lt.s32.totalorder %s8, 2
    // Predicated region
    $region17: #{tpu_custom_call.1} parent=5 // pred_check
      %p116 = pneg %p115
    $region18: #{tpu_custom_call.1} parent=5 // pred_check_branch
      %118 = sbr.rel (%p116) target = $region20
    $region19: #{tpu_custom_call.1} parent=5 // pred_region
      // Predicated region
      $region21: #{tpu_custom_call.1} parent=19 // pred_check
        %p119 = pneg %p63
      $region22: #{tpu_custom_call.1} parent=19 // pred_check_branch
        %121 = sbr.rel (%p119) target = $region24
      $region23: #{tpu_custom_call.1} parent=19 // pred_region
        %p122 = scmp.lt.s32.totalorder %s15, 1
        %s123 = scalar_select %p122, %s15, 1
        %p124 = scmp.lt.s32.totalorder %s16, 0
        %s125 = scalar_select %p124, %s16, 0
        %s126 = smul.addr %s123, 2
        %s127 = sadd.s32 %s125, %s126
        %s128 = smul.addr %s127, 8
        %s129 = scalar_lea.vmem %s1, %s128
      $region24: #{tpu_custom_call.1} parent=19 // pred_fallthru
        _
    $region20: #{tpu_custom_call.1} parent=5 // pred_fallthru
      _
    %p130 = scmp.le.s32.totalorder 1, %s8
    %p131 = scmp.lt.s32.totalorder %s8, 3
    %p132 = pnand %p130, %p131
    %p133 = pneg %p132
    // Predicated region
    $region25: #{tpu_custom_call.1} parent=5 // pred_check
      _
    $region26: #{tpu_custom_call.1} parent=5 // pred_check_branch
      %135 = sbr.rel (%p132) target = $region28
    $region27: #{tpu_custom_call.1} parent=5 // pred_region
      %s136 = ssub.s32 %s8, 1
      %p137 = pneg %p41
      %p138 = pneg %p38
      %p139 = scmp.lt.s32.totalorder %s17, 1
      %s140 = scalar_select %p139, %s17, 1
      %p141 = scmp.lt.s32.totalorder %s18, 0
      %s142 = scalar_select %p141, %s18, 0
      %s143 = smul.addr %s140, 2
      %s144 = sadd.s32 %s142, %s143
      %s145 = smul.addr %s144, 8
      %s146 = scalar_lea.vmem %s1, %s145
      %p147 = pneg %p69
      %p148 = pneg %p66
      %p149 = pneg %p97
      %p150 = pneg %p94
      %p151 = scmp.lt.s32.totalorder %s17, 1
      %s152 = scalar_select %p151, %s17, 1
      %p153 = scmp.lt.s32.totalorder %s18, 0
      %s154 = scalar_select %p153, %s18, 0
      %s155 = smul.addr %s152, 2
      %s156 = sadd.s32 %s154, %s155
      %s157 = smul.addr %s156, 8
      %s158 = scalar_lea.vmem %s2, %s157
      %p159 = scmp.lt.s32.totalorder %s17, 1
      %s160 = scalar_select %p159, %s17, 1
      %p161 = scmp.lt.s32.totalorder %s18, 0
      %s162 = scalar_select %p161, %s18, 0
      %s163 = smul.addr %s160, 2
      %s164 = sadd.s32 %s162, %s163
      %s165 = smul.addr %s164, 8
      %s166 = scalar_lea.vmem %s1, %s165
      %p167 = scmp.lt.s32.totalorder %s17, 1
      %s168 = scalar_select %p167, %s17, 1
      %p169 = scmp.lt.s32.totalorder %s18, 0
      %s170 = scalar_select %p169, %s18, 0
      %s171 = smul.addr %s168, 2
      %s172 = sadd.s32 %s170, %s171
      %s173 = smul.addr %s172, 8
      %s174 = scalar_lea.vmem %s2, %s173
      %v175 = vld [vmem:[%s0] sm:$0xff]
      %v176 = vld [vmem:[%s0 + $0x8] sm:$0xff]
      %v177 = vld [vmem:[%s166] sm:$0xff]
      %v178 = vld [vmem:[%s166 + $0x8] sm:$0xff]
      %vm179 = vcmask 130048
      %v181 = vsel %vm179, %v175, 0
      %v184 = vsel %vm179, %v176, 0
      %186 = vmatprep.subr.mxu0 0.0
      %187 = vmatpush1.msra.mxu0 %v177
      %188 = vmatprep.subr.mxu0 0.0
      %189 = vmatpush1.msra.mxu0 %v178
      %190 = vmatprep.subr.mxu0 0.0
      %191 = vmatpush1.msra.mxu0 0.0
      %192 = vmatprep.subr.mxu0 0.0
      %193 = vmatpush1.msra.mxu0 0.0
      %194 = vmatprep.subr.mxu0 0.0
      %195 = vmatpush1.msra.mxu0 0.0
      %196 = vmatprep.subr.mxu0 0.0
      %197 = vmatpush1.msra.mxu0 0.0
      %198 = vmatprep.subr.mxu0 0.0
      %199 = vmatpush1.msra.mxu0 0.0
      %200 = vmatprep.subr.mxu0 0.0
      %201 = vmatpush1.msra.mxu0 0.0
      %202 = vmatprep.subr.mxu0 0.0
      %203 = vmatpush1.msra.mxu0 0.0
      %204 = vmatprep.subr.mxu0 0.0
      %205 = vmatpush1.msra.mxu0 0.0
      %206 = vmatprep.subr.mxu0 0.0
      %207 = vmatpush1.msra.mxu0 0.0
      %208 = vmatprep.subr.mxu0 0.0
      %209 = vmatpush1.msra.mxu0 0.0
      %210 = vmatprep.subr.mxu0 0.0
      %211 = vmatpush1.msra.mxu0 0.0
      %212 = vmatprep.subr.mxu0 0.0
      %213 = vmatpush1.msra.mxu0 0.0
      %214 = vmatprep.subr.mxu0 0.0
      %215 = vmatpush1.msra.mxu0 0.0
      %216 = vmatprep.subr.mxu0 0.0
      %217 = vmatpush1.msra.mxu0 0.0
      %218 = vmatprep.subr.mxu0 0.0
      %219 = vmatpush1.msra.mxu0 0.0
      %220 = vmatprep.subr.mxu0 0.0
      %221 = vmatpush1.msra.mxu0 0.0
      %222 = vmatprep.subr.mxu0 0.0
      %223 = vmatpush1.msra.mxu0 0.0
      %224 = vmatprep.subr.mxu0 0.0
      %225 = vmatpush1.msra.mxu0 0.0
      %226 = vmatprep.subr.mxu0 0.0
      %227 = vmatpush1.msra.mxu0 0.0
      %228 = vmatprep.subr.mxu0 0.0
      %229 = vmatpush1.msra.mxu0 0.0
      %230 = vmatprep.subr.mxu0 0.0
      %231 = vmatpush1.msra.mxu0 0.0
      %232 = vmatprep.subr.mxu0 0.0
      %233 = vmatpush1.msra.mxu0 0.0
      %234 = vmatprep.subr.mxu0 0.0
      %235 = vmatpush1.msra.mxu0 0.0
      %236 = vmatprep.subr.mxu0 0.0
      %237 = vmatpush1.msra.mxu0 0.0
      %238 = vmatprep.subr.mxu0 0.0
      %239 = vmatpush1.msra.mxu0 0.0
      %240 = vmatprep.subr.mxu0 0.0
      %241 = vmatpush1.msra.mxu0 0.0
      %242 = vmatprep.subr.mxu0 0.0
      %243 = vmatpush1.msra.mxu0 0.0
      %244 = vmatprep.subr.mxu0 0.0
      %245 = vmatpush1.msra.mxu0 0.0
      %246 = vmatprep.subr.mxu0 0.0
      %247 = vmatpush1.msra.mxu0 0.0
      %248 = vmatprep.subr.mxu0 0.0
      %249 = vmatpush1.msra.mxu0 0.0
      %250 = vmatprep.mubr.f32.mxu0 0.0
      %251 = vmatmul.mubr.f32.gmra.mrb[0].mxu0 %v181
      %v252 = vpop.f32.mrb[0].mxu0
      %v253 = vadd.f32 0.0, %v252
      %v254 = vpop.f32.mrb[0].mxu0
      %255 = vmatprep.mubr.f32.mxu0 0.0
      %256 = vmatmul.mubr.f32.gmra.mrb[0].mxu0 %v184
      %v257 = vpop.f32.mrb[0].mxu0
      %v258 = vadd.f32 0.0, %v257
      %v259 = vpop.f32.mrb[0].mxu0
      %260 = vdwg.mxu0
      %vm261 = vcmask 64512
      %262 = vst.msk [vmem:[%s174] sm:$0xff] %vm261, %v253
      %263 = vst.msk [vmem:[%s174 + $0x8] sm:$0xff] %vm261, %v258
      %p264 = scmp.lt.s32.totalorder %s17, 1
      %s265 = scalar_select %p264, %s17, 1
      %p266 = scmp.lt.s32.totalorder %s18, 0
      %s267 = scalar_select %p266, %s18, 0
      %s268 = smul.addr %s265, 2
      %s269 = sadd.s32 %s267, %s268
      %s270 = smul.addr %s269, 8
      %s271 = scalar_lea.vmem %s2, %s270
      // Predicated region
      $region29: #{tpu_custom_call.1} parent=27 // pred_check
        %p272 = pneg %p94
      $region30: #{tpu_custom_call.1} parent=27 // pred_check_branch
        %274 = sbr.rel (%p272) target = $region32
      $region31: #{tpu_custom_call.1} parent=27 // pred_region
        _
      $region32: #{tpu_custom_call.1} parent=27 // pred_fallthru
        _
    $region28: #{tpu_custom_call.1} parent=5 // pred_fallthru
      _
    %p275 = scmp.le.s32.totalorder 2, %s8
    // Predicated region
    $region33: #{tpu_custom_call.1} parent=5 // pred_check
      %p276 = pneg %p275
    $region34: #{tpu_custom_call.1} parent=5 // pred_check_branch
      %278 = sbr.rel (%p276) target = $region36
    $region35: #{tpu_custom_call.1} parent=5 // pred_region
      %s279 = ssub.s32 %s8, 2
      // Predicated region
      $region37: #{tpu_custom_call.1} parent=35 // pred_check
        %p280 = pneg %p100
      $region38: #{tpu_custom_call.1} parent=35 // pred_check_branch
        %282 = sbr.rel (%p280) target = $region40
      $region39: #{tpu_custom_call.1} parent=35 // pred_region
        %p283 = scmp.lt.s32.totalorder %s19, 1
        %s284 = scalar_select %p283, %s19, 1
        %p285 = scmp.lt.s32.totalorder %s20, 0
        %s286 = scalar_select %p285, %s20, 0
        %s287 = smul.addr %s284, 2
        %s288 = sadd.s32 %s286, %s287
        %s289 = smul.addr %s288, 8
        %s290 = scalar_lea.vmem %s2, %s289
      $region40: #{tpu_custom_call.1} parent=35 // pred_fallthru
        _
    $region36: #{tpu_custom_call.1} parent=5 // pred_fallthru
      _
  $region6: #{tpu_custom_call.1} parent=0 // loop_footer
    %s12 = sadd.s32 1, %s8
  $region7: #{tpu_custom_call.1} parent=0 // loop_footer_branch
    %7 = sbr.rel target = $region3
  $region8: #{tpu_custom_call.1} parent=0 // loop_exit
    _

</llo_original>
